<compile_context>
chip_gen: v6e
topology: v6e:2x2x1
jax: 0.10.0
libtpu: 0.0.40
codegen_flags: <defaults>
</compile_context>

<pallas_src>
import functools

import jax
import jax.numpy as jnp
from jax.experimental import pallas as pl
from jax.experimental.pallas import tpu as pltpu

_LANE = 128
_SUBLANE = 8


def _round_up(n, m):
    return ((n + m - 1) // m) * m


def _vmem_capacity_bytes():
    """Physical VMEM per TensorCore, with a conservative (v7x) fallback."""
    try:
        info = pltpu.get_tpu_info()
        cap = getattr(info, "vmem_capacity_bytes", None)
        if cap:
            return int(cap)
    except Exception:
        pass
    return 64 << 20


def _mlp_kernel(x_ref, win_ref, bin_ref, fw_ref, fb_ref, gamma_ref, beta_ref,
                act_ref, h_ref, z_ref,
                *, batch, batch_pad, width_pad, w_dtype):
    """One grid step s:
         s == 0 : h = input_layer(x)
         s >= 1 : h += BN_{s-1}(ReLU(z_prev))              (finish ResBlock s-1)
         all s  : [z_next | act_s] = h @ [rw_s | ow_s]      (one fused MXU launch;
                  the last step streams [0 | ow_depth], so z_next is a throwaway
                  zero tile that is never read)
    """
    s = pl.program_id(0)
    eps = jnp.float32(1e-5)
    inv_b = jnp.float32(1.0 / batch)

    @pl.when(s == 0)
    def _():
        h_ref[...] = (jnp.dot(x_ref[...], win_ref[...],
                              preferred_element_type=jnp.float32)
                      + bin_ref[...])

    @pl.when(s > 0)
    def _():
        r = s - 1
        z = jnp.maximum(z_ref[...], 0.0)
        if batch != batch_pad:
            # Exclude zero-padded batch rows from the BN statistics.
            row = jax.lax.broadcasted_iota(jnp.int32, (batch_pad, 1), 0)
            valid = row < batch
            zm = jnp.where(valid, z, 0.0)
        else:
            valid = None
            zm = z
        # Two-pass batch statistics: mean, then sum((z-mean)^2).  Biased
        # variance, matching PyTorch BatchNorm1d train-mode normalization.
        mean = jnp.sum(zm, axis=0, keepdims=True) * inv_b
        d = z - mean
        dm = jnp.where(valid, d, 0.0) if valid is not None else d
        var = jnp.sum(dm * dm, axis=0, keepdims=True) * inv_b
        zhat = d * jax.lax.rsqrt(var + eps)
        h_ref[...] = h_ref[...] + zhat * gamma_ref[r] + beta_ref[r]

    # Fused residual + head matmul for step s (single steady-state body).
    f = (jnp.dot(h_ref[...].astype(w_dtype), fw_ref[0],
                 preferred_element_type=jnp.float32) + fb_ref[0])
    z_ref[...] = f[:, :width_pad]                          # pre-activation of ResBlock s
    act_ref[0] = f[:, width_pad:].astype(act_ref.dtype)    # head s output (lane-dense block)


def mlp_forward(x, params, *, depth, weight_dtype=jnp.float32,
                out_dtype=jnp.float32):
    win, bin_, rw, rb, gamma, beta, ow, ob = params
    batch, input_dim = x.shape
    width = win.shape[1]
    out_dim = ow.shape[-1]

    w_itemsize = jnp.dtype(weight_dtype).itemsize
    out_itemsize = jnp.dtype(out_dtype).itemsize
    sublane = 16 if w_itemsize == 2 else _SUBLANE   # bf16 vregs pack 16 sublanes

    in_pad = _round_up(input_dim, _LANE)
    w_pad = _round_up(width, _LANE)
    out_pad = _round_up(out_dim, _LANE)
    b_pad = _round_up(batch, sublane)
    n_res = max(depth, 1)

    f32 = jnp.float32
    # MXU operands (x, weights) are cast in the wrapper; BN/ReLU math stays f32.
    xp = (jnp.zeros((b_pad, in_pad), f32)
          .at[:batch, :input_dim].set(x.astype(f32)).astype(weight_dtype))
    winp = (jnp.zeros((in_pad, w_pad), f32)
            .at[:input_dim, :width].set(win).astype(weight_dtype))
    binp = jnp.zeros((1, w_pad), f32).at[:, :width].set(bin_)

    # Streamed per-step fused weights/biases.  Entry s = [rw_s | ow_s] for
    # s < depth; entry depth = [0 | ow_depth] (zero residual half).
    owp = jnp.zeros((depth + 1, w_pad, out_pad), f32).at[:, :width, :out_dim].set(ow)
    obp = jnp.zeros((depth + 1, 1, out_pad), f32).at[:, :, :out_dim].set(ob)
    rwp = jnp.zeros((depth + 1, w_pad, w_pad), f32)
    rbp = jnp.zeros((depth + 1, 1, w_pad), f32)
    if depth > 0:
        rwp = rwp.at[:depth, :width, :width].set(rw)
        rbp = rbp.at[:depth, :, :width].set(rb)
    fw = jnp.concatenate([rwp, owp], axis=-1).astype(weight_dtype)  # (D+1, W, W+O)
    fb = jnp.concatenate([rbp, obp], axis=-1)                       # (D+1, 1, W+O)

    gp = jnp.ones((n_res, 1, w_pad), f32)    # gamma=1 on padded cols keeps them 0
    bp = jnp.zeros((n_res, 1, w_pad), f32)
    if depth > 0:
        gp = gp.at[:, :, :width].set(gamma)
        bp = bp.at[:, :, :width].set(beta)

    kernel = functools.partial(
        _mlp_kernel, batch=batch, batch_pad=b_pad, width_pad=w_pad,
        w_dtype=weight_dtype)

    # VMEM budget: only the streamed fw/fb/out blocks are double-buffered.
    fw_block = w_pad * (w_pad + out_pad) * w_itemsize
    fb_block = (w_pad + out_pad) * 4
    out_block = b_pad * out_pad * out_itemsize
    resident_bytes = (
        xp.nbytes + winp.nbytes + binp.nbytes + gp.nbytes + bp.nbytes
        + 2 * (fw_block + fb_block + out_block)
        + 2 * b_pad * w_pad * 4)                       # h / z scratch
    vmem_budget = int(_vmem_capacity_bytes() * 0.85)   # leave ~15% headroom
    vmem_limit = int(min(max(resident_bytes + (4 << 20), 32 << 20), vmem_budget))

    flops = 2 * b_pad * (in_pad * w_pad + (depth + 1) * w_pad * (w_pad + out_pad))
    bytes_accessed = (xp.nbytes + winp.nbytes + binp.nbytes + fw.nbytes
                      + fb.nbytes + gp.nbytes + bp.nbytes
                      + (depth + 1) * out_block)

    act = pl.pallas_call(
        kernel,
        out_shape=jax.ShapeDtypeStruct((depth + 1, b_pad, out_pad), out_dtype),
        grid_spec=pltpu.PrefetchScalarGridSpec(
            num_scalar_prefetch=0,
            grid=(depth + 1,),
            in_specs=[
                pl.BlockSpec((b_pad, in_pad), lambda s: (0, 0)),
                pl.BlockSpec((in_pad, w_pad), lambda s: (0, 0)),
                pl.BlockSpec((1, w_pad), lambda s: (0, 0)),
                # Per-step fused [rw|ow] weights/biases: streamed, double-buffered.
                pl.BlockSpec((1, w_pad, w_pad + out_pad), lambda s: (s, 0, 0)),
                pl.BlockSpec((1, 1, w_pad + out_pad), lambda s: (s, 0, 0)),
                pl.BlockSpec((n_res, 1, w_pad), lambda s: (0, 0, 0)),
                pl.BlockSpec((n_res, 1, w_pad), lambda s: (0, 0, 0)),
            ],
            # One output tile per step: writeback overlaps compute of step s+1.
            out_specs=pl.BlockSpec((1, b_pad, out_pad), lambda s: (s, 0, 0)),
            scratch_shapes=[pltpu.VMEM((b_pad, w_pad), f32),   # h
                            pltpu.VMEM((b_pad, w_pad), f32)],  # z pre-activation
        ),
        compiler_params=pltpu.CompilerParams(
            dimension_semantics=("arbitrary",),
            vmem_limit_bytes=vmem_limit),
        cost_estimate=pl.CostEstimate(flops=flops,
                                      transcendentals=depth * w_pad,
                                      bytes_accessed=bytes_accessed),
    )(xp, winp, binp, fw, fb, gp, bp)

    return act[:, :batch, :out_dim]


def init_params(key, input_dim, width, output_dim, depth):
    """Deterministic synthetic parameters (PyTorch-like uniform fan-in init)."""
    def linear(k, fan_in, fan_out):
        k1, k2 = jax.random.split(k)
        bound = 1.0 / jnp.sqrt(jnp.float32(fan_in))
        w = jax.random.uniform(k1, (fan_in, fan_out), jnp.float32, -bound, bound)
        b = jax.random.uniform(k2, (1, fan_out), jnp.float32, -bound, bound)
        return w, b

    keys = jax.random.split(key, 2 + 2 * depth + (depth + 1))
    ki = iter(keys)

    win, bin_ = linear(next(ki), input_dim, width)

    rw_list, rb_list = [], []
    for _ in range(depth):
        w, b = linear(next(ki), width, width)
        rw_list.append(w)
        rb_list.append(b)
    rw = jnp.stack(rw_list) if depth > 0 else jnp.zeros((0, width, width), jnp.float32)
    rb = jnp.stack(rb_list) if depth > 0 else jnp.zeros((0, 1, width), jnp.float32)

    gamma = jnp.ones((depth, 1, width), jnp.float32)
    beta = jnp.zeros((depth, 1, width), jnp.float32)

    ow_list, ob_list = [], []
    for _ in range(depth + 1):
        w, b = linear(next(ki), width, output_dim)
        ow_list.append(w)
        ob_list.append(b)
    ow = jnp.stack(ow_list)
    ob = jnp.stack(ob_list)

    return (win, bin_, rw, rb, gamma, beta, ow, ob)


def mlp_reference(x, params, *, depth):
    """Pure-JAX reference mirroring the PyTorch forward (train-mode BN)."""
    (win, bin_, rw, rb, gamma, beta, ow, ob) = params
    h = x @ win + bin_
    acts = [h @ ow[0] + ob[0]]
    for i in range(depth):
        z = jnp.maximum(h @ rw[i] + rb[i], 0.0)
        mean = z.mean(0, keepdims=True)
        var = ((z - mean) ** 2).mean(0, keepdims=True)
        z = (z - mean) / jnp.sqrt(var + 1e-5) * gamma[i] + beta[i]
        h = h + z
        acts.append(h @ ow[i + 1] + ob[i + 1])
    return jnp.stack(acts)


if __name__ == "__main__":
    input_dim, width, output_dim, depth = 16, 32, 4, 3
    batch = 8

    key = jax.random.PRNGKey(0)
    kx, kp = jax.random.split(key)
    x = jax.random.normal(kx, (batch, input_dim), jnp.float32)
    params = init_params(kp, input_dim, width, output_dim, depth)

    # f32 path (default).
    act_vec = jax.block_until_ready(mlp_forward(x, params, depth=depth))
    ref = mlp_reference(x, params, depth=depth)
    assert act_vec.shape == (depth + 1, batch, output_dim), act_vec.shape
    assert jnp.allclose(act_vec, ref, atol=1e-4, rtol=1e-4), "mismatch vs JAX reference"

    # f32 path with batch not a sublane multiple (exercises the BN row mask).
    x6 = x[:6]
    act6 = jax.block_until_ready(mlp_forward(x6, params, depth=depth))
    ref6 = mlp_reference(x6, params, depth=depth)
    assert jnp.allclose(act6, ref6, atol=1e-4, rtol=1e-4), "masked-batch mismatch"

    # depth == 0 edge case (single head directly on the input layer).
    params0 = init_params(kp, input_dim, width, output_dim, 0)
    act0 = jax.block_until_ready(mlp_forward(x, params0, depth=0))
    ref0 = mlp_reference(x, params0, depth=0)
    assert jnp.allclose(act0, ref0, atol=1e-4, rtol=1e-4), "depth=0 mismatch"

    # bf16 weight-streaming path (supported on v5e/v6e/v7x; halves weight DMA).
    act_bf = jax.block_until_ready(
        mlp_forward(x, params, depth=depth,
                    weight_dtype=jnp.bfloat16, out_dtype=jnp.bfloat16))
    assert act_bf.shape == (depth + 1, batch, output_dim), act_bf.shape
    assert jnp.allclose(act_bf.astype(jnp.float32), ref, atol=1e-1, rtol=1e-1), \
        "bf16 path mismatch"

    print("KERNEL_OK")
</pallas_src>

<mosaic_0001>
module attributes {stable_mosaic.version = 11 : i64} {
  func.func @_mlp_kernel(%arg0: i32, %arg1: memref<8x128xf32, #tpu.memory_space<vmem>>, %arg2: memref<128x128xf32, #tpu.memory_space<vmem>>, %arg3: memref<1x128xf32, #tpu.memory_space<vmem>>, %arg4: memref<1x128x256xf32, #tpu.memory_space<vmem>>, %arg5: memref<1x1x256xf32, #tpu.memory_space<vmem>>, %arg6: memref<3x1x128xf32, #tpu.memory_space<vmem>>, %arg7: memref<3x1x128xf32, #tpu.memory_space<vmem>>, %arg8: memref<1x8x128xf32, #tpu.memory_space<vmem>>, %arg9: memref<8x128xf32, #tpu.memory_space<vmem>>, %arg10: memref<8x128xf32, #tpu.memory_space<vmem>>) attributes {dimension_semantics = [#tpu.dimension_semantics<arbitrary>], iteration_bounds = array<i64: 4>, scalar_prefetch = 0 : i64, scratch_operands = 2 : i64, tpu.core_type = #tpu.core_type<tc>, window_params = [{pipeline_mode = #tpu.pipeline_mode<synchronous>, transform_indices = @transform_0, window_bounds = array<i64: 8, 128>}, {pipeline_mode = #tpu.pipeline_mode<synchronous>, transform_indices = @transform_1, window_bounds = array<i64: 128, 128>}, {pipeline_mode = #tpu.pipeline_mode<synchronous>, transform_indices = @transform_2, window_bounds = array<i64: 1, 128>}, {transform_indices = @transform_3, window_bounds = array<i64: 1, 128, 256>}, {transform_indices = @transform_4, window_bounds = array<i64: 1, 1, 256>}, {pipeline_mode = #tpu.pipeline_mode<synchronous>, transform_indices = @transform_5, window_bounds = array<i64: 3, 1, 128>}, {pipeline_mode = #tpu.pipeline_mode<synchronous>, transform_indices = @transform_6, window_bounds = array<i64: 3, 1, 128>}, {transform_indices = @transform_7, window_bounds = array<i64: 1, 8, 128>}]} {
    %c0_i32 = arith.constant 0 : i32
    %0 = arith.cmpi eq, %arg0, %c0_i32 : i32
    %1 = arith.extui %0 : i1 to i32
    %c0_i32_0 = arith.constant 0 : i32
    %2 = arith.cmpi ne, %1, %c0_i32_0 : i32
    scf.if %2 {
      %c0_17 = arith.constant 0 : index
      %c0_18 = arith.constant 0 : index
      %20 = vector.load %arg1[%c0_17, %c0_18] : memref<8x128xf32, #tpu.memory_space<vmem>>, vector<8x128xf32>
      %c0_19 = arith.constant 0 : index
      %c0_20 = arith.constant 0 : index
      %21 = vector.load %arg2[%c0_19, %c0_20] : memref<128x128xf32, #tpu.memory_space<vmem>>, vector<128x128xf32>
      %cst_21 = arith.constant dense<0.000000e+00> : vector<8x128xf32>
      %22 = tpu.matmul %20, %21, %cst_21 {dimension_numbers = #tpu.dot_dimension_numbers<[1], [0], [0], [1], [0, 0, 1, 1], [], []>} : vector<8x128xf32>, vector<128x128xf32>, vector<8x128xf32> -> vector<8x128xf32>
      %c0_22 = arith.constant 0 : index
      %c0_23 = arith.constant 0 : index
      %23 = vector.load %arg3[%c0_22, %c0_23] : memref<1x128xf32, #tpu.memory_space<vmem>>, vector<1x128xf32>
      %24 = vector.broadcast %23 : vector<1x128xf32> to vector<8x128xf32>
      %25 = arith.addf %22, %24 : vector<8x128xf32>
      %c0_24 = arith.constant 0 : index
      %c0_25 = arith.constant 0 : index
      %26 = vector.load %arg9[%c0_24, %c0_25] : memref<8x128xf32, #tpu.memory_space<vmem>>, vector<8x128xf32>
      tpu.vector_store %arg9[%c0_24, %c0_25], %25 {strides = array<i32>} : memref<8x128xf32, #tpu.memory_space<vmem>>, vector<8x128xf32>,
    } else {
    }
    %c0_i32_1 = arith.constant 0 : i32
    %3 = arith.cmpi sgt, %arg0, %c0_i32_1 : i32
    %4 = arith.extui %3 : i1 to i32
    %cst = arith.constant 1.250000e-01 : f32
    %cst_2 = arith.constant 9.99999974E-6 : f32
    %c0_i32_3 = arith.constant 0 : i32
    %5 = arith.cmpi ne, %4, %c0_i32_3 : i32
    scf.if %5 {
      %c1_i32 = arith.constant 1 : i32
      %20 = arith.subi %arg0, %c1_i32 : i32
      %c0_17 = arith.constant 0 : index
      %c0_18 = arith.constant 0 : index
      %21 = vector.load %arg10[%c0_17, %c0_18] : memref<8x128xf32, #tpu.memory_space<vmem>>, vector<8x128xf32>
      %cst_19 = arith.constant 0.000000e+00 : f32
      %22 = vector.broadcast %cst_19 : f32 to vector<8x128xf32>
      %23 = arith.maximumf %21, %22 : vector<8x128xf32>
      %cst_20 = arith.constant dense<0.000000e+00> : vector<128xf32>
      %24 = vector.multi_reduction <add>, %23, %cst_20 [0] : vector<8x128xf32> to vector<128xf32>
      %25 = vector.shape_cast %24 : vector<128xf32> to vector<1x128xf32>
      %26 = vector.broadcast %cst : f32 to vector<1x128xf32>
      %27 = arith.mulf %25, %26 : vector<1x128xf32>
      %28 = vector.broadcast %27 : vector<1x128xf32> to vector<8x128xf32>
      %29 = arith.subf %23, %28 : vector<8x128xf32>
      %30 = arith.mulf %29, %29 : vector<8x128xf32>
      %cst_21 = arith.constant dense<0.000000e+00> : vector<128xf32>
      %31 = vector.multi_reduction <add>, %30, %cst_21 [0] : vector<8x128xf32> to vector<128xf32>
      %32 = vector.shape_cast %31 : vector<128xf32> to vector<1x128xf32>
      %33 = vector.broadcast %cst : f32 to vector<1x128xf32>
      %34 = arith.mulf %32, %33 : vector<1x128xf32>
      %35 = vector.broadcast %cst_2 : f32 to vector<1x128xf32>
      %36 = arith.addf %34, %35 : vector<1x128xf32>
      %37 = math.rsqrt %36 : vector<1x128xf32>
      %38 = vector.broadcast %37 : vector<1x128xf32> to vector<8x128xf32>
      %39 = arith.mulf %29, %38 : vector<8x128xf32>
      %c0_22 = arith.constant 0 : index
      %c0_23 = arith.constant 0 : index
      %40 = vector.load %arg9[%c0_22, %c0_23] : memref<8x128xf32, #tpu.memory_space<vmem>>, vector<8x128xf32>
      %41 = arith.index_cast %20 : i32 to index
      %c0_24 = arith.constant 0 : index
      %c0_25 = arith.constant 0 : index
      %42 = vector.load %arg6[%41, %c0_24, %c0_25] : memref<3x1x128xf32, #tpu.memory_space<vmem>>, vector<1x1x128xf32>
      %43 = vector.shape_cast %42 : vector<1x1x128xf32> to vector<1x128xf32>
      %44 = vector.broadcast %43 : vector<1x128xf32> to vector<8x128xf32>
      %45 = arith.mulf %39, %44 : vector<8x128xf32>
      %46 = arith.addf %40, %45 : vector<8x128xf32>
      %47 = arith.index_cast %20 : i32 to index
      %c0_26 = arith.constant 0 : index
      %c0_27 = arith.constant 0 : index
      %48 = vector.load %arg7[%47, %c0_26, %c0_27] : memref<3x1x128xf32, #tpu.memory_space<vmem>>, vector<1x1x128xf32>
      %49 = vector.shape_cast %48 : vector<1x1x128xf32> to vector<1x128xf32>
      %50 = vector.broadcast %49 : vector<1x128xf32> to vector<8x128xf32>
      %51 = arith.addf %46, %50 : vector<8x128xf32>
      %c0_28 = arith.constant 0 : index
      %c0_29 = arith.constant 0 : index
      %52 = vector.load %arg9[%c0_28, %c0_29] : memref<8x128xf32, #tpu.memory_space<vmem>>, vector<8x128xf32>
      tpu.vector_store %arg9[%c0_28, %c0_29], %51 {strides = array<i32>} : memref<8x128xf32, #tpu.memory_space<vmem>>, vector<8x128xf32>,
    } else {
    }
    %c0 = arith.constant 0 : index
    %c0_4 = arith.constant 0 : index
    %6 = vector.load %arg9[%c0, %c0_4] : memref<8x128xf32, #tpu.memory_space<vmem>>, vector<8x128xf32>
    %c0_5 = arith.constant 0 : index
    %c0_6 = arith.constant 0 : index
    %c0_7 = arith.constant 0 : index
    %7 = vector.load %arg4[%c0_5, %c0_6, %c0_7] : memref<1x128x256xf32, #tpu.memory_space<vmem>>, vector<1x128x256xf32>
    %8 = vector.shape_cast %7 : vector<1x128x256xf32> to vector<128x256xf32>
    %cst_8 = arith.constant dense<0.000000e+00> : vector<8x256xf32>
    %9 = tpu.matmul %6, %8, %cst_8 {dimension_numbers = #tpu.dot_dimension_numbers<[1], [0], [0], [1], [0, 0, 1, 1], [], []>} : vector<8x128xf32>, vector<128x256xf32>, vector<8x256xf32> -> vector<8x256xf32>
    %c0_9 = arith.constant 0 : index
    %c0_10 = arith.constant 0 : index
    %c0_11 = arith.constant 0 : index
    %10 = vector.load %arg5[%c0_9, %c0_10, %c0_11] : memref<1x1x256xf32, #tpu.memory_space<vmem>>, vector<1x1x256xf32>
    %11 = vector.shape_cast %10 : vector<1x1x256xf32> to vector<1x256xf32>
    %12 = vector.broadcast %11 : vector<1x256xf32> to vector<8x256xf32>
    %13 = arith.addf %9, %12 : vector<8x256xf32>
    %14 = vector.extract_strided_slice %13 {offsets = [0, 0], sizes = [8, 128], strides = [1, 1]} : vector<8x256xf32> to vector<8x128xf32>
    %c0_12 = arith.constant 0 : index
    %c0_13 = arith.constant 0 : index
    %15 = vector.load %arg10[%c0_12, %c0_13] : memref<8x128xf32, #tpu.memory_space<vmem>>, vector<8x128xf32>
    tpu.vector_store %arg10[%c0_12, %c0_13], %14 {strides = array<i32>} : memref<8x128xf32, #tpu.memory_space<vmem>>, vector<8x128xf32>,
    %16 = vector.extract_strided_slice %13 {offsets = [0, 128], sizes = [8, 128], strides = [1, 1]} : vector<8x256xf32> to vector<8x128xf32>
    %c0_14 = arith.constant 0 : index
    %c0_15 = arith.constant 0 : index
    %c0_16 = arith.constant 0 : index
    %17 = vector.load %arg8[%c0_14, %c0_15, %c0_16] : memref<1x8x128xf32, #tpu.memory_space<vmem>>, vector<1x8x128xf32>
    %18 = vector.shape_cast %17 : vector<1x8x128xf32> to vector<8x128xf32>
    %19 = vector.shape_cast %16 : vector<8x128xf32> to vector<1x8x128xf32>
    tpu.vector_store %arg8[%c0_14, %c0_15, %c0_16], %19 {strides = array<i32>} : memref<1x8x128xf32, #tpu.memory_space<vmem>>, vector<1x8x128xf32>,
    return
  }
  func.func @transform_0(%arg0: i32) -> (i32, i32) {
    %c0_i32 = arith.constant 0 : i32
    %c0_i32_0 = arith.constant 0 : i32
    %c0_i32_1 = arith.constant 0 : i32
    return %c0_i32, %c0_i32_0 : i32, i32
  }
  func.func @transform_1(%arg0: i32) -> (i32, i32) {
    %c0_i32 = arith.constant 0 : i32
    %c0_i32_0 = arith.constant 0 : i32
    %c0_i32_1 = arith.constant 0 : i32
    return %c0_i32, %c0_i32_0 : i32, i32
  }
  func.func @transform_2(%arg0: i32) -> (i32, i32) {
    %c0_i32 = arith.constant 0 : i32
    %c0_i32_0 = arith.constant 0 : i32
    %c0_i32_1 = arith.constant 0 : i32
    return %c0_i32, %c0_i32_0 : i32, i32
  }
  func.func @transform_3(%arg0: i32) -> (i32, i32, i32) {
    %c0_i32 = arith.constant 0 : i32
    %c0_i32_0 = arith.constant 0 : i32
    %c0_i32_1 = arith.constant 0 : i32
    return %arg0, %c0_i32, %c0_i32_0 : i32, i32, i32
  }
  func.func @transform_4(%arg0: i32) -> (i32, i32, i32) {
    %c0_i32 = arith.constant 0 : i32
    %c0_i32_0 = arith.constant 0 : i32
    %c0_i32_1 = arith.constant 0 : i32
    return %arg0, %c0_i32, %c0_i32_0 : i32, i32, i32
  }
  func.func @transform_5(%arg0: i32) -> (i32, i32, i32) {
    %c0_i32 = arith.constant 0 : i32
    %c0_i32_0 = arith.constant 0 : i32
    %c0_i32_1 = arith.constant 0 : i32
    %c0_i32_2 = arith.constant 0 : i32
    return %c0_i32, %c0_i32_0, %c0_i32_1 : i32, i32, i32
  }
  func.func @transform_6(%arg0: i32) -> (i32, i32, i32) {
    %c0_i32 = arith.constant 0 : i32
    %c0_i32_0 = arith.constant 0 : i32
    %c0_i32_1 = arith.constant 0 : i32
    %c0_i32_2 = arith.constant 0 : i32
    return %c0_i32, %c0_i32_0, %c0_i32_1 : i32, i32, i32
  }
  func.func @transform_7(%arg0: i32) -> (i32, i32, i32) {
    %c0_i32 = arith.constant 0 : i32
    %c0_i32_0 = arith.constant 0 : i32
    %c0_i32_1 = arith.constant 0 : i32
    return %arg0, %c0_i32, %c0_i32_0 : i32, i32, i32
  }
}

</mosaic_0001>

<llo_original>
// kernel: tpu_custom_call.1
$region0: #{tpu_custom_call.1}
  #allocation0 [shape = 'u32[]', space=smem, size = 0x4, offset = 0x4, fixed_abs, tag = 'smem constant byte address 0x4 - core index']
  #allocation1 [shape = 'u32[144,128]{1,0:T(1,128)}', space=vmem, size = 0x12000, scoped, tag = 'internal scratch']
  #allocation2 [shape = 'f32[8,128]{1,0:T(8,128)}', space=vmem, size = 0x1000, scoped, tag = 'scratch operand']
  #allocation3 [shape = 'f32[8,128]{1,0:T(8,128)}', space=vmem, size = 0x1000, scoped, tag = 'scratch operand']
  %s0 = inlined_call_operand.hbm [shape: f32[8,128], index: 0, kind: input, shape index: {}]
  %s1 = inlined_call_operand.hbm [shape: f32[128,128], index: 1, kind: input, shape index: {}]
  %s2 = inlined_call_operand.vmem [shape: f32[1,128], index: 2, kind: input, shape index: {}]
  %s3 = inlined_call_operand.hbm [shape: f32[4,128,256], index: 3, kind: input, shape index: {}]
  %s4 = inlined_call_operand.hbm [shape: f32[4,1,256], index: 4, kind: input, shape index: {}]
  %s5 = inlined_call_operand.vmem [shape: f32[3,1,128], index: 5, kind: input, shape index: {}]
  %s6 = inlined_call_operand.vmem [shape: f32[3,1,128], index: 6, kind: input, shape index: {}]
  %s7 = inlined_call_operand.hbm [shape: f32[4,8,128], index: 7, kind: output, shape index: {}]
  %s8 = sld [smem:[#allocation0]]
  $region85: #{tpu_custom_call.1} parent=0
    _
  %s10 = ssub.s32 1, %s8
  %s11 = scalar_select 0, %s10, %s8
  $region1: #{tpu_custom_call.1} parent=0
    #allocation4 [shape = 'u8[4096]{0}', space=vmem, size = 0x1000, scoped, tag = 'input window, operand 0, single buffered']
    #allocation5 [shape = 's32[2]{0}', space=sflag, size = 0x8, scoped, tag = 'scoped memory for tpu_custom_call.1']
    #allocation6 [shape = 's32[2]{0}', space=sflag, size = 0x8, scoped, tag = 'scoped memory for tpu_custom_call.1']
    #allocation7 [shape = 'u8[65536]{0}', space=vmem, size = 0x10000, scoped, tag = 'input window, operand 1, single buffered']
    #allocation8 [shape = 's32[1]{0}', space=sflag, size = 0x4, scoped, tag = 'scoped memory for tpu_custom_call.1']
    #allocation9 [shape = 'u8[262144]{0}', space=vmem, size = 0x40000, scoped, tag = 'input window, operand 3']
    #allocation10 [shape = 'u8[2048]{0}', space=vmem, size = 0x800, scoped, tag = 'input window, operand 4']
    #allocation11 [shape = 'u8[8192]{0}', space=vmem, size = 0x2000, scoped, tag = 'output window, operand 0']
    %12 = vsyncpa [#allocation5], 0
    %13 = vsyncpa [#allocation8], 0
    %14 = vsyncpa [#allocation6], 0
    %s15 = scalar_lea.sflag [#allocation6], 1
    %16 = vsyncpa %s15, 0
    loop: start=0, step=1, limit=6
    $region2: #{tpu_custom_call.1} parent=1 // loop_pre_header
      _
    $region3: #{tpu_custom_call.1} parent=1 // loop_header
      %s18 = sphi 0, %s22
      %p19 = scmp.ge.s32.totalorder %s18, 6
      %s26 = sphi 0, %s26
      %s28 = sphi 0, %s26
      %s29 = sphi 0, %s28
      %s43 = sphi 0, %s29
      %s47 = sphi 0, %s47
      %s49 = sphi 0, %s47
      %s50 = sphi 0, %s49
      %s64 = sphi 0, %s50
      %s68 = sphi 0, %s68
      %s70 = sphi 0, %s68
      %s71 = sphi 0, %s70
      %s85 = sphi 0, %s71
      %s91 = sphi 0, %s93
      %s94 = sphi 0, %s91
      %s95 = sphi 0, %s94
      %s111 = sphi 0, %s95
      %s117 = sphi 0, %s119
      %s120 = sphi 0, %s117
      %s121 = sphi 0, %s120
      %s137 = sphi 0, %s121
      %s141 = sphi 0, %s141
      %s143 = sphi 0, %s141
      %s144 = sphi 0, %s143
      %s158 = sphi 0, %s144
      %s162 = sphi 0, %s162
      %s164 = sphi 0, %s162
      %s165 = sphi 0, %s164
      %s179 = sphi 0, %s165
      %s185 = sphi 0, %s187
      %s188 = sphi 0, %s185
      %s189 = sphi 0, %s188
      %s205 = sphi 0, %s189
    $region4: #{tpu_custom_call.1} parent=1 // loop_header_branch
      %21 = sbr.rel (%p19) target = $region8
    $region5: #{tpu_custom_call.1} parent=1 // loop_body
      %s23 = ssub.s32 %s18, 1
      %s24 = ssub.s32 %s18, 2
      %s25 = sadd.s32 %s18, 1
      %s27 = sadd.s32 %s26, 1
      %p30 = scmp.eq.s32.totalorder %s18, 3
      %p31 = scmp.ne.s32.totalorder %s26, %s28
      %p32 = scmp.eq.s32.totalorder %s18, 0
      %p33 = por %p31, %p32
      %p34 = scmp.ne.s32.totalorder %s26, %s28
      %p35 = scmp.eq.s32.totalorder %s23, 3
      %p36 = por %p34, %p35
      %p37 = scmp.ne.s32.totalorder %s28, %s29
      %p38 = scmp.eq.s32.totalorder %s23, 0
      %p39 = por %p37, %p38
      %p40 = scmp.ne.s32.totalorder %s28, %s29
      %p41 = scmp.eq.s32.totalorder %s24, 3
      %p42 = por %p40, %p41
      %p44 = scmp.ne.s32.totalorder %s29, %s43
      %p45 = scmp.eq.s32.totalorder %s24, 0
      %p46 = por %p44, %p45
      %s48 = sadd.s32 %s47, 1
      %p51 = scmp.eq.s32.totalorder %s18, 3
      %p52 = scmp.ne.s32.totalorder %s47, %s49
      %p53 = scmp.eq.s32.totalorder %s18, 0
      %p54 = por %p52, %p53
      %p55 = scmp.ne.s32.totalorder %s47, %s49
      %p56 = scmp.eq.s32.totalorder %s23, 3
      %p57 = por %p55, %p56
      %p58 = scmp.ne.s32.totalorder %s49, %s50
      %p59 = scmp.eq.s32.totalorder %s23, 0
      %p60 = por %p58, %p59
      %p61 = scmp.ne.s32.totalorder %s49, %s50
      %p62 = scmp.eq.s32.totalorder %s24, 3
      %p63 = por %p61, %p62
      %p65 = scmp.ne.s32.totalorder %s50, %s64
      %p66 = scmp.eq.s32.totalorder %s24, 0
      %p67 = por %p65, %p66
      %s69 = sadd.s32 %s68, 1
      %p72 = scmp.eq.s32.totalorder %s18, 3
      %p73 = scmp.ne.s32.totalorder %s68, %s70
      %p74 = scmp.eq.s32.totalorder %s18, 0
      %p75 = por %p73, %p74
      %p76 = scmp.ne.s32.totalorder %s68, %s70
      %p77 = scmp.eq.s32.totalorder %s23, 3
      %p78 = por %p76, %p77
      %p79 = scmp.ne.s32.totalorder %s70, %s71
      %p80 = scmp.eq.s32.totalorder %s23, 0
      %p81 = por %p79, %p80
      %p82 = scmp.ne.s32.totalorder %s70, %s71
      %p83 = scmp.eq.s32.totalorder %s24, 3
      %p84 = por %p82, %p83
      %p86 = scmp.ne.s32.totalorder %s71, %s85
      %p87 = scmp.eq.s32.totalorder %s24, 0
      %p88 = por %p86, %p87
      %s89 = ssub.s32 %s18, %s25
      %p90 = scmp.eq.s32.totalorder %s89, 0
      %s92 = sadd.s32 %s91, 1
      %s93 = scalar_select %p90, %s91, %s92
      %p96 = pneg %p90
      %p97 = scmp.eq.s32.totalorder %s18, 3
      %p98 = por %p96, %p97
      %p99 = scmp.ne.s32.totalorder %s91, %s94
      %p100 = scmp.eq.s32.totalorder %s18, 0
      %p101 = por %p99, %p100
      %p102 = scmp.ne.s32.totalorder %s91, %s94
      %p103 = scmp.eq.s32.totalorder %s23, 3
      %p104 = por %p102, %p103
      %p105 = scmp.ne.s32.totalorder %s94, %s95
      %p106 = scmp.eq.s32.totalorder %s23, 0
      %p107 = por %p105, %p106
      %p108 = scmp.ne.s32.totalorder %s94, %s95
      %p109 = scmp.eq.s32.totalorder %s24, 3
      %p110 = por %p108, %p109
      %p112 = scmp.ne.s32.totalorder %s95, %s111
      %p113 = scmp.eq.s32.totalorder %s24, 0
      %p114 = por %p112, %p113
      %s115 = ssub.s32 %s18, %s25
      %p116 = scmp.eq.s32.totalorder %s115, 0
      %s118 = sadd.s32 %s117, 1
      %s119 = scalar_select %p116, %s117, %s118
      %p122 = pneg %p116
      %p123 = scmp.eq.s32.totalorder %s18, 3
      %p124 = por %p122, %p123
      %p125 = scmp.ne.s32.totalorder %s117, %s120
      %p126 = scmp.eq.s32.totalorder %s18, 0
      %p127 = por %p125, %p126
      %p128 = scmp.ne.s32.totalorder %s117, %s120
      %p129 = scmp.eq.s32.totalorder %s23, 3
      %p130 = por %p128, %p129
      %p131 = scmp.ne.s32.totalorder %s120, %s121
      %p132 = scmp.eq.s32.totalorder %s23, 0
      %p133 = por %p131, %p132
      %p134 = scmp.ne.s32.totalorder %s120, %s121
      %p135 = scmp.eq.s32.totalorder %s24, 3
      %p136 = por %p134, %p135
      %p138 = scmp.ne.s32.totalorder %s121, %s137
      %p139 = scmp.eq.s32.totalorder %s24, 0
      %p140 = por %p138, %p139
      %s142 = sadd.s32 %s141, 1
      %p145 = scmp.eq.s32.totalorder %s18, 3
      %p146 = scmp.ne.s32.totalorder %s141, %s143
      %p147 = scmp.eq.s32.totalorder %s18, 0
      %p148 = por %p146, %p147
      %p149 = scmp.ne.s32.totalorder %s141, %s143
      %p150 = scmp.eq.s32.totalorder %s23, 3
      %p151 = por %p149, %p150
      %p152 = scmp.ne.s32.totalorder %s143, %s144
      %p153 = scmp.eq.s32.totalorder %s23, 0
      %p154 = por %p152, %p153
      %p155 = scmp.ne.s32.totalorder %s143, %s144
      %p156 = scmp.eq.s32.totalorder %s24, 3
      %p157 = por %p155, %p156
      %p159 = scmp.ne.s32.totalorder %s144, %s158
      %p160 = scmp.eq.s32.totalorder %s24, 0
      %p161 = por %p159, %p160
      %s163 = sadd.s32 %s162, 1
      %p166 = scmp.eq.s32.totalorder %s18, 3
      %p167 = scmp.ne.s32.totalorder %s162, %s164
      %p168 = scmp.eq.s32.totalorder %s18, 0
      %p169 = por %p167, %p168
      %p170 = scmp.ne.s32.totalorder %s162, %s164
      %p171 = scmp.eq.s32.totalorder %s23, 3
      %p172 = por %p170, %p171
      %p173 = scmp.ne.s32.totalorder %s164, %s165
      %p174 = scmp.eq.s32.totalorder %s23, 0
      %p175 = por %p173, %p174
      %p176 = scmp.ne.s32.totalorder %s164, %s165
      %p177 = scmp.eq.s32.totalorder %s24, 3
      %p178 = por %p176, %p177
      %p180 = scmp.ne.s32.totalorder %s165, %s179
      %p181 = scmp.eq.s32.totalorder %s24, 0
      %p182 = por %p180, %p181
      %s183 = ssub.s32 %s18, %s25
      %p184 = scmp.eq.s32.totalorder %s183, 0
      %s186 = sadd.s32 %s185, 1
      %s187 = scalar_select %p184, %s185, %s186
      %p190 = pneg %p184
      %p191 = scmp.eq.s32.totalorder %s18, 3
      %p192 = por %p190, %p191
      %p193 = scmp.ne.s32.totalorder %s185, %s188
      %p194 = scmp.eq.s32.totalorder %s18, 0
      %p195 = por %p193, %p194
      %p196 = scmp.ne.s32.totalorder %s185, %s188
      %p197 = scmp.eq.s32.totalorder %s23, 3
      %p198 = por %p196, %p197
      %p199 = scmp.ne.s32.totalorder %s188, %s189
      %p200 = scmp.eq.s32.totalorder %s23, 0
      %p201 = por %p199, %p200
      %p202 = scmp.ne.s32.totalorder %s188, %s189
      %p203 = scmp.eq.s32.totalorder %s24, 3
      %p204 = por %p202, %p203
      %p206 = scmp.ne.s32.totalorder %s189, %s205
      %p207 = scmp.eq.s32.totalorder %s24, 0
      %p208 = por %p206, %p207
      %p209 = scmp.le.s32.totalorder 1, %s18
      %p210 = scmp.lt.s32.totalorder %s18, 5
      %p211 = pnand %p209, %p210
      %p212 = pneg %p211
      // Predicated region
      $region9: #{tpu_custom_call.1} parent=5 // pred_check
        _
      $region10: #{tpu_custom_call.1} parent=5 // pred_check_branch
        %214 = sbr.rel (%p211) target = $region12
      $region11: #{tpu_custom_call.1} parent=5 // pred_region
        %s215 = ssub.s32 %s18, 1
        // Predicated region
        $region13: #{tpu_custom_call.1} parent=11 // pred_check
          %p216 = pneg %p39
        $region14: #{tpu_custom_call.1} parent=11 // pred_check_branch
          %218 = sbr.rel (%p216) target = $region16
        $region15: #{tpu_custom_call.1} parent=11 // pred_region
          %s220 = ssub.s32 128, 128
          %221 = vsyncadd [#allocation5], %s220
          %s223 = sshll.u32 [#allocation4], 4
          %s224 = int_to_ptr.vmem [resolvable:$true] %s223
          %226 = dma.hbm_to_vmem [thread:$0]  %s0, 128, %s224, [#allocation5]
        $region16: #{tpu_custom_call.1} parent=11 // pred_fallthru
          _
        // Predicated region
        $region17: #{tpu_custom_call.1} parent=11 // pred_check
          %p227 = pneg %p60
        $region18: #{tpu_custom_call.1} parent=11 // pred_check_branch
          %229 = sbr.rel (%p227) target = $region20
        $region19: #{tpu_custom_call.1} parent=11 // pred_region
          %s231 = ssub.s32 2048, 2048
          %232 = vsyncadd [#allocation8], %s231
          %s233 = sshll.u32 [#allocation7], 4
          %s234 = int_to_ptr.vmem [resolvable:$true] %s233
          %239 = dma.hbm_to_vmem [thread:$0]  %s1, 2048, %s234, [#allocation8], 128, 128, 8
        $region20: #{tpu_custom_call.1} parent=11 // pred_fallthru
          _
        // Predicated region
        $region21: #{tpu_custom_call.1} parent=11 // pred_check
          %p240 = pneg %p81
        $region22: #{tpu_custom_call.1} parent=11 // pred_check_branch
          %242 = sbr.rel (%p240) target = $region24
        $region23: #{tpu_custom_call.1} parent=11 // pred_region
          _
        $region24: #{tpu_custom_call.1} parent=11 // pred_fallthru
          _
        // Predicated region
        $region25: #{tpu_custom_call.1} parent=11 // pred_check
          %p243 = pneg %p154
        $region26: #{tpu_custom_call.1} parent=11 // pred_check_branch
          %245 = sbr.rel (%p243) target = $region28
        $region27: #{tpu_custom_call.1} parent=11 // pred_region
          _
        $region28: #{tpu_custom_call.1} parent=11 // pred_fallthru
          _
        // Predicated region
        $region29: #{tpu_custom_call.1} parent=11 // pred_check
          %p246 = pneg %p175
        $region30: #{tpu_custom_call.1} parent=11 // pred_check_branch
          %248 = sbr.rel (%p246) target = $region32
        $region31: #{tpu_custom_call.1} parent=11 // pred_region
          _
        $region32: #{tpu_custom_call.1} parent=11 // pred_fallthru
          _
      $region12: #{tpu_custom_call.1} parent=5 // pred_fallthru
        _
      %p249 = scmp.lt.s32.totalorder %s18, 4
      // Predicated region
      $region33: #{tpu_custom_call.1} parent=5 // pred_check
        %p250 = pneg %p249
      $region34: #{tpu_custom_call.1} parent=5 // pred_check_branch
        %252 = sbr.rel (%p250) target = $region36
      $region35: #{tpu_custom_call.1} parent=5 // pred_region
        // Predicated region
        $region37: #{tpu_custom_call.1} parent=35 // pred_check
          %p253 = pneg %p101
        $region38: #{tpu_custom_call.1} parent=35 // pred_check_branch
          %255 = sbr.rel (%p253) target = $region40
        $region39: #{tpu_custom_call.1} parent=35 // pred_region
          %s256 = sand.u32 %s18, 1
          %s257 = scalar_lea.sflag [#allocation5], %s256
          %s258 = sand.u32 %s91, 1
          %s259 = smul.addr %s258, 256
          %s260 = scalar_lea.vmem [#allocation9], %s259
          %s262 = ssub.s32 4096, 4096
          %263 = vsyncadd %s257, %s262
          %s264 = smul.addr %s18, 32
          %s265 = smul.addr %s264, 128
          %s266 = scalar_lea.hbm %s3, %s265
          %s267 = sshll.u32 %s260, 4
          %s268 = int_to_ptr.vmem [resolvable:$true] %s267
          %273 = dma.hbm_to_vmem [thread:$0]  %s266, 4096, %s268, %s257, 256, 256, 16
        $region40: #{tpu_custom_call.1} parent=35 // pred_fallthru
          _
        // Predicated region
        $region41: #{tpu_custom_call.1} parent=35 // pred_check
          %p274 = pneg %p127
        $region42: #{tpu_custom_call.1} parent=35 // pred_check_branch
          %276 = sbr.rel (%p274) target = $region44
        $region43: #{tpu_custom_call.1} parent=35 // pred_region
          %s277 = sand.u32 %s18, 1
          %s278 = scalar_lea.sflag [#allocation5], %s277
          %s279 = sand.u32 %s117, 1
          %s280 = smul.addr %s279, 2
          %s281 = scalar_lea.vmem [#allocation10], %s280
          %s283 = ssub.s32 32, 32
          %284 = vsyncadd %s278, %s283
          %s285 = smul.addr %s18, 2
          %s286 = smul.addr %s285, 16
          %s287 = scalar_lea.hbm %s4, %s286
          %s289 = sshll.u32 %s281, 4
          %s290 = int_to_ptr.vmem [resolvable:$true] %s289
          %292 = dma.hbm_to_vmem [thread:$0]  %s287, 32, %s290, %s278
        $region44: #{tpu_custom_call.1} parent=35 // pred_fallthru
          _
      $region36: #{tpu_custom_call.1} parent=5 // pred_fallthru
        _
      %p293 = scmp.le.s32.totalorder 1, %s18
      %p294 = scmp.lt.s32.totalorder %s18, 5
      %p295 = pnand %p293, %p294
      %p296 = pneg %p295
      // Predicated region
      $region45: #{tpu_custom_call.1} parent=5 // pred_check
        _
      $region46: #{tpu_custom_call.1} parent=5 // pred_check_branch
        %298 = sbr.rel (%p295) target = $region48
      $region47: #{tpu_custom_call.1} parent=5 // pred_region
        %s299 = ssub.s32 %s18, 1
        // Predicated region
        $region49: #{tpu_custom_call.1} parent=47 // pred_check
          %p300 = pneg %p39
        $region50: #{tpu_custom_call.1} parent=47 // pred_check_branch
          %302 = sbr.rel (%p300) target = $region52
        $region51: #{tpu_custom_call.1} parent=47 // pred_region
          %303 = dma.done [#allocation5], 128
        $region52: #{tpu_custom_call.1} parent=47 // pred_fallthru
          _
        // Predicated region
        $region53: #{tpu_custom_call.1} parent=47 // pred_check
          %p304 = pneg %p60
        $region54: #{tpu_custom_call.1} parent=47 // pred_check_branch
          %306 = sbr.rel (%p304) target = $region56
        $region55: #{tpu_custom_call.1} parent=47 // pred_region
          %307 = dma.done [#allocation8], 2048
        $region56: #{tpu_custom_call.1} parent=47 // pred_fallthru
          _
        %s308 = sand.u32 %s23, 1
        %s309 = scalar_lea.sflag [#allocation5], %s308
        %s310 = sand.u32 %s94, 1
        %s311 = smul.addr %s310, 256
        %s312 = scalar_lea.vmem [#allocation9], %s311
        // Predicated region
        $region57: #{tpu_custom_call.1} parent=47 // pred_check
          %p313 = pneg %p107
        $region58: #{tpu_custom_call.1} parent=47 // pred_check_branch
          %315 = sbr.rel (%p313) target = $region60
        $region59: #{tpu_custom_call.1} parent=47 // pred_region
          %316 = dma.done %s309, 4096
        $region60: #{tpu_custom_call.1} parent=47 // pred_fallthru
          _
        %s317 = sand.u32 %s23, 1
        %s318 = scalar_lea.sflag [#allocation5], %s317
        %s319 = sand.u32 %s120, 1
        %s320 = smul.addr %s319, 2
        %s321 = scalar_lea.vmem [#allocation10], %s320
        // Predicated region
        $region61: #{tpu_custom_call.1} parent=47 // pred_check
          %p322 = pneg %p133
        $region62: #{tpu_custom_call.1} parent=47 // pred_check_branch
          %324 = sbr.rel (%p322) target = $region64
        $region63: #{tpu_custom_call.1} parent=47 // pred_region
          %325 = dma.done %s318, 32
        $region64: #{tpu_custom_call.1} parent=47 // pred_fallthru
          _
        %p326 = pneg %p39
        %p327 = pneg %p36
        %p328 = pneg %p60
        %p329 = pneg %p57
        %p330 = pneg %p81
        %p331 = pneg %p78
        %s332 = sand.u32 %s23, 1
        %s333 = scalar_lea.sflag [#allocation5], %s332
        %s334 = sand.u32 %s94, 1
        %s335 = smul.addr %s334, 256
        %s336 = scalar_lea.vmem [#allocation9], %s335
        %p337 = pneg %p107
        %p338 = pneg %p104
        %s339 = sand.u32 %s23, 1
        %s340 = scalar_lea.sflag [#allocation5], %s339
        %s341 = sand.u32 %s120, 1
        %s342 = smul.addr %s341, 2
        %s343 = scalar_lea.vmem [#allocation10], %s342
        %p344 = pneg %p133
        %p345 = pneg %p130
        %p346 = pneg %p154
        %p347 = pneg %p151
        %p348 = pneg %p175
        %p349 = pneg %p172
        %p350 = pneg %p201
        %p351 = pneg %p198
        %s352 = sand.u32 %s188, 1
        %s353 = scalar_lea.sflag [#allocation6], %s352
        %s354 = sand.u32 %s188, 1
        %s355 = smul.addr %s354, 8
        %s356 = scalar_lea.vmem [#allocation11], %s355
        %p357 = scmp.eq.s32.totalorder %s23, 0
        // Predicated region
        $region65: #{tpu_custom_call.1} parent=47 // pred_check
          %p358 = pneg %p357
        $region66: #{tpu_custom_call.1} parent=47 // pred_check_branch
          %360 = sbr.rel (%p358) target = $region68
        $region67: #{tpu_custom_call.1} parent=47 // pred_region
          %v361 = vld [vmem:[#allocation4] sm:$0xff]
          %v362 = vld [vmem:[#allocation7] sm:$0xff]
          %v363 = vld [vmem:[#allocation7 + $0x8] sm:$0xff]
          %v364 = vld [vmem:[#allocation7 + $0x10] sm:$0xff]
          %v365 = vld [vmem:[#allocation7 + $0x18] sm:$0xff]
          %v366 = vld [vmem:[#allocation7 + $0x20] sm:$0xff]
          %v367 = vld [vmem:[#allocation7 + $0x28] sm:$0xff]
          %v368 = vld [vmem:[#allocation7 + $0x30] sm:$0xff]
          %v369 = vld [vmem:[#allocation7 + $0x38] sm:$0xff]
          %v370 = vld [vmem:[#allocation7 + $0x40] sm:$0xff]
          %v371 = vld [vmem:[#allocation7 + $0x48] sm:$0xff]
          %v372 = vld [vmem:[#allocation7 + $0x50] sm:$0xff]
          %v373 = vld [vmem:[#allocation7 + $0x58] sm:$0xff]
          %v374 = vld [vmem:[#allocation7 + $0x60] sm:$0xff]
          %v375 = vld [vmem:[#allocation7 + $0x68] sm:$0xff]
          %v376 = vld [vmem:[#allocation7 + $0x70] sm:$0xff]
          %v377 = vld [vmem:[#allocation7 + $0x78] sm:$0xff]
          %v378 = vld [vmem:[%s2] sm:$0x1]
          %v380 = vlaneseq
          %v381 = vshrl.u32 %v380, 7
          %v382 = vsub.s32 0, %v381
          %v383 = vrot.slane %v378, %v382
          %385 = vmatprep.subr.mxu0 0.0
          %386 = vmatpush1.msra.mxu0 %v377
          %387 = vmatprep.subr.mxu0 0.0
          %388 = vmatpush1.msra.mxu0 %v376
          %389 = vmatprep.subr.mxu0 0.0
          %390 = vmatpush1.msra.mxu0 %v375
          %391 = vmatprep.subr.mxu0 0.0
          %392 = vmatpush1.msra.mxu0 %v374
          %393 = vmatprep.subr.mxu0 0.0
          %394 = vmatpush1.msra.mxu0 %v373
          %395 = vmatprep.subr.mxu0 0.0
          %396 = vmatpush1.msra.mxu0 %v372
          %397 = vmatprep.subr.mxu0 0.0
          %398 = vmatpush1.msra.mxu0 %v371
          %399 = vmatprep.subr.mxu0 0.0
          %400 = vmatpush1.msra.mxu0 %v370
          %401 = vmatprep.subr.mxu0 0.0
          %402 = vmatpush1.msra.mxu0 %v369
          %403 = vmatprep.subr.mxu0 0.0
          %404 = vmatpush1.msra.mxu0 %v368
          %405 = vmatprep.subr.mxu0 0.0
          %406 = vmatpush1.msra.mxu0 %v367
          %407 = vmatprep.subr.mxu0 0.0
          %408 = vmatpush1.msra.mxu0 %v366
          %409 = vmatprep.subr.mxu0 0.0
          %410 = vmatpush1.msra.mxu0 %v365
          %411 = vmatprep.subr.mxu0 0.0
          %412 = vmatpush1.msra.mxu0 %v364
          %413 = vmatprep.subr.mxu0 0.0
          %414 = vmatpush1.msra.mxu0 %v363
          %415 = vmatprep.subr.mxu0 0.0
          %416 = vmatpush1.msra.mxu0 %v362
          %417 = vmatprep.subr.mxu0 0.0
          %418 = vmatpush2.msra.mxu0 0.0
          %419 = vmatprep.subr.mxu0 0.0
          %420 = vmatpush2.msra.mxu0 0.0
          %421 = vmatprep.subr.mxu0 0.0
          %422 = vmatpush2.msra.mxu0 0.0
          %423 = vmatprep.subr.mxu0 0.0
          %424 = vmatpush2.msra.mxu0 0.0
          %425 = vmatprep.subr.mxu0 0.0
          %426 = vmatpush2.msra.mxu0 0.0
          %427 = vmatprep.subr.mxu0 0.0
          %428 = vmatpush2.msra.mxu0 0.0
          %429 = vmatprep.subr.mxu0 0.0
          %430 = vmatpush2.msra.mxu0 0.0
          %431 = vmatprep.subr.mxu0 0.0
          %432 = vmatpush2.msra.mxu0 0.0
          %433 = vmatprep.subr.mxu0 0.0
          %434 = vmatpush2.msra.mxu0 0.0
          %435 = vmatprep.subr.mxu0 0.0
          %436 = vmatpush2.msra.mxu0 0.0
          %437 = vmatprep.subr.mxu0 0.0
          %438 = vmatpush2.msra.mxu0 0.0
          %439 = vmatprep.subr.mxu0 0.0
          %440 = vmatpush2.msra.mxu0 0.0
          %441 = vmatprep.subr.mxu0 0.0
          %442 = vmatpush2.msra.mxu0 0.0
          %443 = vmatprep.subr.mxu0 0.0
          %444 = vmatpush2.msra.mxu0 0.0
          %445 = vmatprep.subr.mxu0 0.0
          %446 = vmatpush2.msra.mxu0 0.0
          %447 = vmatprep.subr.mxu0 0.0
          %448 = vmatpush2.msra.mxu0 0.0
          %449 = vmatprep.mubr.f32.mxu0 0.0
          %450 = vmatmul.mubr.f32.gmra.mxu0 %v361
          %v451 = vpop.f32.mrf.mxu0
          %v452 = vadd.f32 %v383, %v451
          %v453 = vpop.f32.mrf.mxu0
          %454 = vdwg.mxu0
          %455 = vst [vmem:[#allocation2] sm:$0xff] %v452
        $region68: #{tpu_custom_call.1} parent=47 // pred_fallthru
          _
        %p456 = scmp.gt.s32.totalorder %s23, 0
        // Predicated region
        $region69: #{tpu_custom_call.1} parent=47 // pred_check
          %p457 = pneg %p456
        $region70: #{tpu_custom_call.1} parent=47 // pred_check_branch
          %459 = sbr.rel (%p457) target = $region72
        $region71: #{tpu_custom_call.1} parent=47 // pred_region
          %s460 = ssub.s32 %s23, 1
          %v461 = vld [vmem:[#allocation3] sm:$0xff]
          %v462 = vmax.f32 %v461, 0.0
          %v463 = vrot.slane %v462, 4
          %v464 = vadd.f32 %v462, %v463
          %v465 = vrot.slane %v464, 2
          %v466 = vadd.f32 %v464, %v465
          %v467 = vrot.slane %v466, 1
          %v468 = vadd.f32 %v466, %v467
          %v469 = vmul.f32 %v468, 0.125
          %v470 = vsub.f32 %v462, %v469
          %v471 = vmul.f32 %v470, %v470
          %v472 = vrot.slane %v471, 4
          %v473 = vadd.f32 %v471, %v472
          %v474 = vrot.slane %v473, 2
          %v475 = vadd.f32 %v473, %v474
          %v476 = vrot.slane %v475, 1
          %v477 = vadd.f32 %v475, %v476
          %v478 = vmul.f32 %v477, 0.125
          %v479 = vadd.f32 %v478, 1e-05
          %v480 = vrsqrt.pop %v479
          %v481 = vmul.f32 %v470, %v480
          %v482 = vld [vmem:[#allocation2] sm:$0xff]
          %s483 = scalar_lea.vmem %s5, %s460
          %v484 = vld [vmem:[%s483] sm:$0x1]
          %v486 = vlaneseq
          %v487 = vshrl.u32 %v486, 7
          %v488 = vsub.s32 0, %v487
          %v489 = vrot.slane %v484, %v488
          %v491 = vmul.f32 %v481, %v489
          %v492 = vadd.f32 %v482, %v491
          %s493 = scalar_lea.vmem %s6, %s460
          %v494 = vld [vmem:[%s493] sm:$0x1]
          %v496 = vlaneseq
          %v497 = vshrl.u32 %v496, 7
          %v498 = vsub.s32 0, %v497
          %v499 = vrot.slane %v494, %v498
          %v501 = vadd.f32 %v492, %v499
          %502 = vst [vmem:[#allocation2] sm:$0xff] %v501
        $region72: #{tpu_custom_call.1} parent=47 // pred_fallthru
          _
        %v503 = vld [vmem:[#allocation2] sm:$0xff]
        %v504 = vld [vmem:[%s312] sm:$0xff]
        %v505 = vld [vmem:[%s312 + $0x8] sm:$0xff]
        %v506 = vld [vmem:[%s312 + $0x10] sm:$0xff]
        %v507 = vld [vmem:[%s312 + $0x18] sm:$0xff]
        %v508 = vld [vmem:[%s312 + $0x20] sm:$0xff]
        %v509 = vld [vmem:[%s312 + $0x28] sm:$0xff]
        %v510 = vld [vmem:[%s312 + $0x30] sm:$0xff]
        %v511 = vld [vmem:[%s312 + $0x38] sm:$0xff]
        %v512 = vld [vmem:[%s312 + $0x40] sm:$0xff]
        %v513 = vld [vmem:[%s312 + $0x48] sm:$0xff]
        %v514 = vld [vmem:[%s312 + $0x50] sm:$0xff]
        %v515 = vld [vmem:[%s312 + $0x58] sm:$0xff]
        %v516 = vld [vmem:[%s312 + $0x60] sm:$0xff]
        %v517 = vld [vmem:[%s312 + $0x68] sm:$0xff]
        %v518 = vld [vmem:[%s312 + $0x70] sm:$0xff]
        %v519 = vld [vmem:[%s312 + $0x78] sm:$0xff]
        %v520 = vld [vmem:[%s312 + $0x80] sm:$0xff]
        %v521 = vld [vmem:[%s312 + $0x88] sm:$0xff]
        %v522 = vld [vmem:[%s312 + $0x90] sm:$0xff]
        %v523 = vld [vmem:[%s312 + $0x98] sm:$0xff]
        %v524 = vld [vmem:[%s312 + $0xa0] sm:$0xff]
        %v525 = vld [vmem:[%s312 + $0xa8] sm:$0xff]
        %v526 = vld [vmem:[%s312 + $0xb0] sm:$0xff]
        %v527 = vld [vmem:[%s312 + $0xb8] sm:$0xff]
        %v528 = vld [vmem:[%s312 + $0xc0] sm:$0xff]
        %v529 = vld [vmem:[%s312 + $0xc8] sm:$0xff]
        %v530 = vld [vmem:[%s312 + $0xd0] sm:$0xff]
        %v531 = vld [vmem:[%s312 + $0xd8] sm:$0xff]
        %v532 = vld [vmem:[%s312 + $0xe0] sm:$0xff]
        %v533 = vld [vmem:[%s312 + $0xe8] sm:$0xff]
        %v534 = vld [vmem:[%s312 + $0xf0] sm:$0xff]
        %v535 = vld [vmem:[%s312 + $0xf8] sm:$0xff]
        %v536 = vld [vmem:[%s321] sm:$0x3]
        %v538 = vlaneseq
        %v539 = vshrl.u32 %v538, 7
        %v540 = vsub.s32 0, %v539
        %v541 = vrot.slane %v536, %v540
        %v542 = vlaneseq
        %v543 = vshrl.u32 %v542, 7
        %v544 = vsub.s32 1, %v543
        %v545 = vrot.slane %v536, %v544
        %548 = vmatprep.subr.mxu0 %v535
        %549 = vmatpush1.msra.mxu0 %v534
        %550 = vmatprep.subr.mxu0 %v533
        %551 = vmatpush1.msra.mxu0 %v532
        %552 = vmatprep.subr.mxu0 %v531
        %553 = vmatpush1.msra.mxu0 %v530
        %554 = vmatprep.subr.mxu0 %v529
        %555 = vmatpush1.msra.mxu0 %v528
        %556 = vmatprep.subr.mxu0 %v527
        %557 = vmatpush1.msra.mxu0 %v526
        %558 = vmatprep.subr.mxu0 %v525
        %559 = vmatpush1.msra.mxu0 %v524
        %560 = vmatprep.subr.mxu0 %v523
        %561 = vmatpush1.msra.mxu0 %v522
        %562 = vmatprep.subr.mxu0 %v521
        %563 = vmatpush1.msra.mxu0 %v520
        %564 = vmatprep.subr.mxu0 %v519
        %565 = vmatpush1.msra.mxu0 %v518
        %566 = vmatprep.subr.mxu0 %v517
        %567 = vmatpush1.msra.mxu0 %v516
        %568 = vmatprep.subr.mxu0 %v515
        %569 = vmatpush1.msra.mxu0 %v514
        %570 = vmatprep.subr.mxu0 %v513
        %571 = vmatpush1.msra.mxu0 %v512
        %572 = vmatprep.subr.mxu0 %v511
        %573 = vmatpush1.msra.mxu0 %v510
        %574 = vmatprep.subr.mxu0 %v509
        %575 = vmatpush1.msra.mxu0 %v508
        %576 = vmatprep.subr.mxu0 %v507
        %577 = vmatpush1.msra.mxu0 %v506
        %578 = vmatprep.subr.mxu0 %v505
        %579 = vmatpush1.msra.mxu0 %v504
        %580 = vmatprep.subr.mxu0 0.0
        %581 = vmatpush2.msra.mxu0 0.0
        %582 = vmatprep.subr.mxu0 0.0
        %583 = vmatpush2.msra.mxu0 0.0
        %584 = vmatprep.subr.mxu0 0.0
        %585 = vmatpush2.msra.mxu0 0.0
        %586 = vmatprep.subr.mxu0 0.0
        %587 = vmatpush2.msra.mxu0 0.0
        %588 = vmatprep.subr.mxu0 0.0
        %589 = vmatpush2.msra.mxu0 0.0
        %590 = vmatprep.subr.mxu0 0.0
        %591 = vmatpush2.msra.mxu0 0.0
        %592 = vmatprep.subr.mxu0 0.0
        %593 = vmatpush2.msra.mxu0 0.0
        %594 = vmatprep.subr.mxu0 0.0
        %595 = vmatpush2.msra.mxu0 0.0
        %596 = vmatprep.subr.mxu0 0.0
        %597 = vmatpush2.msra.mxu0 0.0
        %598 = vmatprep.subr.mxu0 0.0
        %599 = vmatpush2.msra.mxu0 0.0
        %600 = vmatprep.subr.mxu0 0.0
        %601 = vmatpush2.msra.mxu0 0.0
        %602 = vmatprep.subr.mxu0 0.0
        %603 = vmatpush2.msra.mxu0 0.0
        %604 = vmatprep.subr.mxu0 0.0
        %605 = vmatpush2.msra.mxu0 0.0
        %606 = vmatprep.subr.mxu0 0.0
        %607 = vmatpush2.msra.mxu0 0.0
        %608 = vmatprep.subr.mxu0 0.0
        %609 = vmatpush2.msra.mxu0 0.0
        %610 = vmatprep.subr.mxu0 0.0
        %611 = vmatpush2.msra.mxu0 0.0
        %612 = vmatprep.mubr.f32.mxu0 0.0
        %613 = vmatmul.mubr.f32.gmra.mxu0 %v503
        %v614 = vpop.f32.mrf.mxu0
        %v615 = vadd.f32 %v541, %v614
        %v616 = vpop.f32.mrf.mxu0
        %v617 = vadd.f32 %v545, %v616
        %618 = vdwg.mxu0
        %619 = vst [vmem:[#allocation3] sm:$0xff] %v615
        %620 = vst [vmem:[%s356] sm:$0xff] %v617
        %s621 = sand.u32 %s188, 1
        %s622 = scalar_lea.sflag [#allocation6], %s621
        %s623 = sand.u32 %s188, 1
        %s624 = smul.addr %s623, 8
        %s625 = scalar_lea.vmem [#allocation11], %s624
        // Predicated region
        $region73: #{tpu_custom_call.1} parent=47 // pred_check
          %p626 = pneg %p198
        $region74: #{tpu_custom_call.1} parent=47 // pred_check_branch
          %628 = sbr.rel (%p626) target = $region76
        $region75: #{tpu_custom_call.1} parent=47 // pred_region
          %s630 = ssub.s32 128, 128
          %631 = vsyncadd %s622, %s630
          %s632 = smul.addr %s23, 128
          %s633 = scalar_lea.hbm %s7, %s632
          %s635 = sshll.u32 %s625, 4
          %s636 = int_to_ptr.vmem [resolvable:$true] %s635
          %638 = dma.vmem_to_hbm [thread:$0]  %s636, 128, %s633, %s622
        $region76: #{tpu_custom_call.1} parent=47 // pred_fallthru
          _
      $region48: #{tpu_custom_call.1} parent=5 // pred_fallthru
        _
      %p639 = scmp.le.s32.totalorder 2, %s18
      // Predicated region
      $region77: #{tpu_custom_call.1} parent=5 // pred_check
        %p640 = pneg %p639
      $region78: #{tpu_custom_call.1} parent=5 // pred_check_branch
        %642 = sbr.rel (%p640) target = $region80
      $region79: #{tpu_custom_call.1} parent=5 // pred_region
        %s643 = ssub.s32 %s18, 2
        // Predicated region
        $region81: #{tpu_custom_call.1} parent=79 // pred_check
          %p644 = pneg %p204
        $region82: #{tpu_custom_call.1} parent=79 // pred_check_branch
          %646 = sbr.rel (%p644) target = $region84
        $region83: #{tpu_custom_call.1} parent=79 // pred_region
          %s647 = sand.u32 %s189, 1
          %s648 = scalar_lea.sflag [#allocation6], %s647
          %s649 = sand.u32 %s189, 1
          %s650 = smul.addr %s649, 8
          %s651 = scalar_lea.vmem [#allocation11], %s650
          %652 = dma.done %s648, 128
        $region84: #{tpu_custom_call.1} parent=79 // pred_fallthru
          _
      $region80: #{tpu_custom_call.1} parent=5 // pred_fallthru
        _
    $region6: #{tpu_custom_call.1} parent=1 // loop_footer
      %s22 = sadd.s32 1, %s18
    $region7: #{tpu_custom_call.1} parent=1 // loop_footer_branch
      %17 = sbr.rel target = $region3
    $region8: #{tpu_custom_call.1} parent=1 // loop_exit
      _
    %653 = vsyncpa [#allocation5], 1
    %s654 = scalar_lea.sflag [#allocation5], 1
    %655 = vsyncpa %s654, 1
    %656 = vsyncpa [#allocation8], 1
    %657 = vsyncpa [#allocation6], 1
    %s658 = scalar_lea.sflag [#allocation6], 1
    %659 = vsyncpa %s658, 1

</llo_original>
